<compile_context>
chip_gen: v6e
topology: v6e:2x2x1
jax: 0.10.0
libtpu: 0.0.40
codegen_flags: <defaults>
</compile_context>

<pallas_src>
import jax
import jax.numpy as jnp
from jax import lax
from jax.experimental import pallas as pl
from jax.experimental.pallas import tpu as pltpu


# --------------------------------------------------------------------------- #
# In-kernel math
# --------------------------------------------------------------------------- #
def _erf(x):
    # Abramowitz & Stegun 7.1.26 (|err| < 1.5e-7 vs exact erf); only
    # exp/mul/add/where + EUP reciprocal, so it lowers cleanly in Mosaic and
    # matches torch's exact-erf GELU to well below the test tolerance.
    a1, a2, a3, a4, a5 = 0.254829592, -0.284496736, 1.421413741, -1.453152027, 1.061405429
    p = 0.3275911
    ax = jnp.abs(x)
    d = 1.0 + p * ax
    # Approximate reciprocal runs on the EUP (off the VALU critical path);
    # one Newton step restores ~f32 accuracy.
    t = pl.reciprocal(d, approx=True)
    t = t * (2.0 - d * t)
    poly = ((((a5 * t + a4) * t + a3) * t + a2) * t + a1) * t
    y = 1.0 - poly * jnp.exp(-ax * ax)
    return jnp.where(x >= 0.0, y, -y)


def _gelu_exact(x):
    return 0.5 * x * (1.0 + _erf(x * 0.7071067811865476))


def _ff_kernel(x_ref, w1_ref, b1_ref, w2_ref, b2_ref, o_ref, acc_ref):
    # Grid: (row tile i, hidden tile m). x/out blocks are constant over m, so
    # Pallas keeps them resident; acc_ref accumulates the second matmul over m.
    m = pl.program_id(1)

    @pl.when(m == 0)
    def _():
        acc_ref[...] = jnp.zeros_like(acc_ref)

    # MXU gets native-dtype operands (bf16 stays bf16); accumulate in f32.
    h = jnp.dot(x_ref[...], w1_ref[...], preferred_element_type=jnp.float32)
    h = h + b1_ref[...].astype(jnp.float32)
    h = _gelu_exact(h)
    # Dropout(p=0.0) is the identity in the forward pass.
    acc_ref[...] += jnp.dot(h.astype(w2_ref.dtype), w2_ref[...],
                            preferred_element_type=jnp.float32)

    @pl.when(m == pl.num_programs(1) - 1)
    def _():
        o_ref[...] = (acc_ref[...] + b2_ref[...].astype(jnp.float32)).astype(o_ref.dtype)


# --------------------------------------------------------------------------- #
# Tiling heuristics
# --------------------------------------------------------------------------- #
def _round_up(a, b):
    return (a + b - 1) // b * b


def _sublane(dtype):
    # Sub-32-bit dtypes pack along sublanes: min row tile 8 (f32) / 16 (bf16)
    # / 32 (int8, fp8).
    bits = jnp.dtype(dtype).itemsize * 8
    return {32: 8, 16: 16, 8: 32}.get(bits, 8)


def _pick_block_rows(R, sub, target):
    """Choose the row tile. Prefers a tile that divides R exactly (no HBM
    pad / slice copies) and yields an even grid (v7x megacore)."""
    if R <= sub:
        return sub, _round_up(R, sub)
    cap = min(_round_up(target, sub), _round_up(R, sub))
    best_even = best_one = best_any = None
    tr = cap
    while tr >= sub:
        if R % tr == 0:
            g = R // tr
            if g % 2 == 0 and best_even is None:
                best_even = tr
            elif g == 1 and best_one is None:
                best_one = tr
            elif best_any is None:
                best_any = tr
        tr -= sub
    for tr in (best_even, best_one, best_any):
        if tr is not None:
            return tr, R
    # No exact divisor: pad the rows (rare; ragged tail).
    tr = cap
    return tr, _round_up(R, tr)


def _vmem_bytes(tr, D, tm, x_bytes, w_bytes, out_bytes):
    buf = 2  # Pallas double-buffers pipelined inputs/outputs.
    wgt = buf * (D * tm + tm * D) * w_bytes        # w1 + w2 tiles
    bias = buf * (tm + D) * 4                      # b1 + b2 (kept f32)
    xio = buf * tr * D * (x_bytes + out_bytes)     # x tile + out tile
    acc = tr * D * 4                               # f32 accumulator scratch
    return wgt + bias + xio + acc


def _pick_tm(D, M, tr, x_bytes, w_bytes, out_bytes, budget):
    """Hidden-dim tile: multiple of 128 (lane-dense) unless it equals M."""
    if M % 128 != 0:
        return M  # block must equal the full dim when it is not lane-aligned
    cands = [M] + [t for t in (4096, 2048, 1024, 512, 256, 128)
                   if t < M and M % t == 0]
    for tm in cands:
        if _vmem_bytes(tr, D, tm, x_bytes, w_bytes, out_bytes) <= budget:
            return tm
    return cands[-1]


# --------------------------------------------------------------------------- #
# Wrapper
# --------------------------------------------------------------------------- #
def feed_forward(x, params, *, block_rows=None, vmem_budget_bytes=48 * 2**20):
    """Applies FeedForward to x of shape (..., dim)."""
    orig_shape = x.shape
    D = orig_shape[-1]
    R = 1
    for s in orig_shape[:-1]:
        R *= s
    x2d = x.reshape(R, D)

    # Weights stored (in, out): y = x @ W + b. Matmul operands are cast to the
    # activation dtype (bf16 stays bf16 -> native MXU rate); biases and all
    # accumulation stay f32.
    w1 = params["w1"].astype(x.dtype)
    w2 = params["w2"].astype(x.dtype)
    b1 = params["b1"].astype(jnp.float32)
    b2 = params["b2"].astype(jnp.float32)
    M = w1.shape[1]

    x_bytes = jnp.dtype(x.dtype).itemsize
    w_bytes = jnp.dtype(w1.dtype).itemsize
    out_bytes = x_bytes

    sub = _sublane(x.dtype)
    if block_rows is None:
        # target=256 is safe across v5e/v6e/v7x; sweep up to 512 on v5e/v6e.
        tr, R_pad = _pick_block_rows(R, sub, target=256)
    else:
        tr = _round_up(block_rows, sub)
        R_pad = _round_up(R, tr)
    if R_pad != R:
        # TODO(synk): handle the ragged tail with a masked store instead of an
        # HBM pad + slice when R is not a multiple of the row tile.
        x2d = jnp.pad(x2d, ((0, R_pad - R), (0, 0)))
    grid_n = R_pad // tr

    tm = _pick_tm(D, M, tr, x_bytes, w_bytes, out_bytes, vmem_budget_bytes)
    grid_m = M // tm

    footprint = _vmem_bytes(tr, D, tm, x_bytes, w_bytes, out_bytes)
    vmem_limit = min(64 * 2**20, max(32 * 2**20, int(1.25 * footprint)))

    flops = 4 * R_pad * D * M  # two (rows, D) x (D, M)-class matmuls
    bytes_accessed = (R_pad * D * (x_bytes + out_bytes)
                      + 2 * D * M * w_bytes * grid_n)
    cost = pl.CostEstimate(flops=flops, transcendentals=R_pad * M,
                           bytes_accessed=bytes_accessed)

    out2d = pl.pallas_call(
        _ff_kernel,
        out_shape=jax.ShapeDtypeStruct((R_pad, D), x.dtype),
        grid_spec=pltpu.PrefetchScalarGridSpec(
            num_scalar_prefetch=0,
            grid=(grid_n, grid_m),
            in_specs=[
                pl.BlockSpec((tr, D), lambda i, m: (i, 0)),   # x rows (const over m)
                pl.BlockSpec((D, tm), lambda i, m: (0, m)),   # w1 column tile
                pl.BlockSpec((1, tm), lambda i, m: (0, m)),   # b1 tile
                pl.BlockSpec((tm, D), lambda i, m: (m, 0)),   # w2 row tile
                pl.BlockSpec((1, D), lambda i, m: (0, 0)),    # b2 (constant)
            ],
            out_specs=pl.BlockSpec((tr, D), lambda i, m: (i, 0)),
            scratch_shapes=[pltpu.VMEM((tr, D), jnp.float32)],
        ),
        compiler_params=pltpu.CompilerParams(
            dimension_semantics=("parallel", "arbitrary"),
            vmem_limit_bytes=vmem_limit,
        ),
        cost_estimate=cost,
    )(x2d, w1, b1, w2, b2)

    if R_pad != R:
        out2d = out2d[:R]
    return out2d.reshape(orig_shape)


def make_ff_params(key, dim, hidden_dim):
    # Weights stored as (in, out): y = x @ W + b, equivalent to torch's
    # x @ W_t.T with W_t of shape (out, in).
    k1, k2, k3, k4 = jax.random.split(key, 4)
    s = 0.02
    f32 = jnp.float32
    return {
        "w1": s * jax.random.normal(k1, (dim, hidden_dim), f32),
        "b1": s * jax.random.normal(k2, (1, hidden_dim), f32),
        "w2": s * jax.random.normal(k3, (hidden_dim, dim), f32),
        "b2": s * jax.random.normal(k4, (1, dim), f32),
    }


def _feed_forward_ref(x, params):
    h = x @ params["w1"] + params["b1"][0]
    h = 0.5 * h * (1.0 + lax.erf(h * 0.7071067811865476))  # exact GELU
    return h @ params["w2"] + params["b2"][0]


if __name__ == "__main__":
    # Lane-dense sizes (multiples of 128) so stores are unmasked and the MXU is
    # fully fed; still small enough for a quick smoke test.
    B, N, D, HID = 2, 8, 128, 256

    key = jax.random.PRNGKey(0)
    key, xk, pk = jax.random.split(key, 3)
    x = jax.random.normal(xk, (B, N, D), jnp.float32)
    params = make_ff_params(pk, D, HID)

    out = feed_forward(x, params)
    jax.block_until_ready(out)
    assert out.shape == (B, N, D)

    ref = _feed_forward_ref(x, params)
    err = float(jnp.max(jnp.abs(out - ref)))
    assert jnp.allclose(out, ref, atol=1e-4, rtol=1e-4), err

    print("KERNEL_OK")
</pallas_src>

<mosaic_0001>
module attributes {stable_mosaic.version = 11 : i64} {
  func.func @_ff_kernel(%arg0: i32, %arg1: i32, %arg2: memref<8x128xf32, #tpu.memory_space<vmem>>, %arg3: memref<128x256xf32, #tpu.memory_space<vmem>>, %arg4: memref<1x256xf32, #tpu.memory_space<vmem>>, %arg5: memref<256x128xf32, #tpu.memory_space<vmem>>, %arg6: memref<1x128xf32, #tpu.memory_space<vmem>>, %arg7: memref<8x128xf32, #tpu.memory_space<vmem>>, %arg8: memref<8x128xf32, #tpu.memory_space<vmem>>) attributes {dimension_semantics = [#tpu.dimension_semantics<parallel>, #tpu.dimension_semantics<arbitrary>], iteration_bounds = array<i64: 2, 1>, scalar_prefetch = 0 : i64, scratch_operands = 1 : i64, tpu.core_type = #tpu.core_type<tc>, window_params = [{transform_indices = @transform_0, window_bounds = array<i64: 8, 128>}, {transform_indices = @transform_1, window_bounds = array<i64: 128, 256>}, {transform_indices = @transform_2, window_bounds = array<i64: 1, 256>}, {transform_indices = @transform_3, window_bounds = array<i64: 256, 128>}, {pipeline_mode = #tpu.pipeline_mode<synchronous>, transform_indices = @transform_4, window_bounds = array<i64: 1, 128>}, {transform_indices = @transform_5, window_bounds = array<i64: 8, 128>}]} {
    %c0_i32 = arith.constant 0 : i32
    %0 = arith.cmpi eq, %arg1, %c0_i32 : i32
    %1 = arith.extui %0 : i1 to i32
    %c0_i32_0 = arith.constant 0 : i32
    %2 = arith.cmpi ne, %1, %c0_i32_0 : i32
    scf.if %2 {
      %cst_30 = arith.constant 0.000000e+00 : f32
      %60 = vector.broadcast %cst_30 : f32 to vector<8x128xf32>
      %c0_31 = arith.constant 0 : index
      %c0_32 = arith.constant 0 : index
      %61 = vector.load %arg8[%c0_31, %c0_32] : memref<8x128xf32, #tpu.memory_space<vmem>>, vector<8x128xf32>
      tpu.vector_store %arg8[%c0_31, %c0_32], %60 {strides = array<i32>} : memref<8x128xf32, #tpu.memory_space<vmem>>, vector<8x128xf32>,
    } else {
    }
    %c0 = arith.constant 0 : index
    %c0_1 = arith.constant 0 : index
    %3 = vector.load %arg2[%c0, %c0_1] : memref<8x128xf32, #tpu.memory_space<vmem>>, vector<8x128xf32>
    %c0_2 = arith.constant 0 : index
    %c0_3 = arith.constant 0 : index
    %4 = vector.load %arg3[%c0_2, %c0_3] : memref<128x256xf32, #tpu.memory_space<vmem>>, vector<128x256xf32>
    %cst = arith.constant dense<0.000000e+00> : vector<8x256xf32>
    %5 = tpu.matmul %3, %4, %cst {dimension_numbers = #tpu.dot_dimension_numbers<[1], [0], [0], [1], [0, 0, 1, 1], [], []>} : vector<8x128xf32>, vector<128x256xf32>, vector<8x256xf32> -> vector<8x256xf32>
    %c0_4 = arith.constant 0 : index
    %c0_5 = arith.constant 0 : index
    %6 = vector.load %arg4[%c0_4, %c0_5] : memref<1x256xf32, #tpu.memory_space<vmem>>, vector<1x256xf32>
    %7 = vector.broadcast %6 : vector<1x256xf32> to vector<8x256xf32>
    %8 = arith.addf %5, %7 : vector<8x256xf32>
    %cst_6 = arith.constant 5.000000e-01 : f32
    %9 = vector.broadcast %cst_6 : f32 to vector<8x256xf32>
    %10 = arith.mulf %9, %8 : vector<8x256xf32>
    %cst_7 = arith.constant 0.707106769 : f32
    %11 = vector.broadcast %cst_7 : f32 to vector<8x256xf32>
    %12 = arith.mulf %8, %11 : vector<8x256xf32>
    %13 = math.absf %12 : vector<8x256xf32>
    %cst_8 = arith.constant 0.327591091 : f32
    %14 = vector.broadcast %cst_8 : f32 to vector<8x256xf32>
    %15 = arith.mulf %14, %13 : vector<8x256xf32>
    %cst_9 = arith.constant 1.000000e+00 : f32
    %16 = vector.broadcast %cst_9 : f32 to vector<8x256xf32>
    %17 = arith.addf %16, %15 : vector<8x256xf32>
    %18 = tpu.reciprocal %17 {approx = true} : vector<8x256xf32> -> vector<8x256xf32>
    %19 = arith.mulf %17, %18 : vector<8x256xf32>
    %cst_10 = arith.constant 2.000000e+00 : f32
    %20 = vector.broadcast %cst_10 : f32 to vector<8x256xf32>
    %21 = arith.subf %20, %19 : vector<8x256xf32>
    %22 = arith.mulf %18, %21 : vector<8x256xf32>
    %cst_11 = arith.constant 1.06140542 : f32
    %23 = vector.broadcast %cst_11 : f32 to vector<8x256xf32>
    %24 = arith.mulf %23, %22 : vector<8x256xf32>
    %cst_12 = arith.constant -1.45315206 : f32
    %25 = vector.broadcast %cst_12 : f32 to vector<8x256xf32>
    %26 = arith.addf %24, %25 : vector<8x256xf32>
    %27 = arith.mulf %26, %22 : vector<8x256xf32>
    %cst_13 = arith.constant 1.42141378 : f32
    %28 = vector.broadcast %cst_13 : f32 to vector<8x256xf32>
    %29 = arith.addf %27, %28 : vector<8x256xf32>
    %30 = arith.mulf %29, %22 : vector<8x256xf32>
    %cst_14 = arith.constant -0.284496725 : f32
    %31 = vector.broadcast %cst_14 : f32 to vector<8x256xf32>
    %32 = arith.addf %30, %31 : vector<8x256xf32>
    %33 = arith.mulf %32, %22 : vector<8x256xf32>
    %cst_15 = arith.constant 0.254829586 : f32
    %34 = vector.broadcast %cst_15 : f32 to vector<8x256xf32>
    %35 = arith.addf %33, %34 : vector<8x256xf32>
    %36 = arith.mulf %35, %22 : vector<8x256xf32>
    %cst_16 = arith.constant 0.000000e+00 : f32
    %37 = vector.broadcast %cst_16 : f32 to vector<8x256xf32>
    %38 = arith.subf %37, %13 : vector<8x256xf32>
    %39 = arith.mulf %38, %13 : vector<8x256xf32>
    %40 = math.exp %39 : vector<8x256xf32>
    %41 = arith.mulf %36, %40 : vector<8x256xf32>
    %cst_17 = arith.constant 1.000000e+00 : f32
    %42 = vector.broadcast %cst_17 : f32 to vector<8x256xf32>
    %43 = arith.subf %42, %41 : vector<8x256xf32>
    %cst_18 = arith.constant 0.000000e+00 : f32
    %44 = vector.broadcast %cst_18 : f32 to vector<8x256xf32>
    %45 = arith.cmpf oge, %12, %44 : vector<8x256xf32>
    %cst_19 = arith.constant 0.000000e+00 : f32
    %46 = vector.broadcast %cst_19 : f32 to vector<8x256xf32>
    %47 = arith.subf %46, %43 : vector<8x256xf32>
    %48 = arith.select %45, %43, %47 : vector<8x256xi1>, vector<8x256xf32>
    %cst_20 = arith.constant 1.000000e+00 : f32
    %49 = vector.broadcast %cst_20 : f32 to vector<8x256xf32>
    %50 = arith.addf %49, %48 : vector<8x256xf32>
    %51 = arith.mulf %10, %50 : vector<8x256xf32>
    %c0_21 = arith.constant 0 : index
    %c0_22 = arith.constant 0 : index
    %52 = vector.load %arg8[%c0_21, %c0_22] : memref<8x128xf32, #tpu.memory_space<vmem>>, vector<8x128xf32>
    %c0_23 = arith.constant 0 : index
    %c0_24 = arith.constant 0 : index
    %53 = vector.load %arg5[%c0_23, %c0_24] : memref<256x128xf32, #tpu.memory_space<vmem>>, vector<256x128xf32>
    %cst_25 = arith.constant dense<0.000000e+00> : vector<8x128xf32>
    %54 = tpu.matmul %51, %53, %cst_25 {dimension_numbers = #tpu.dot_dimension_numbers<[1], [0], [0], [1], [0, 0, 1, 1], [], []>} : vector<8x256xf32>, vector<256x128xf32>, vector<8x128xf32> -> vector<8x128xf32>
    %55 = arith.addf %52, %54 : vector<8x128xf32>
    %c0_26 = arith.constant 0 : index
    %c0_27 = arith.constant 0 : index
    %56 = vector.load %arg8[%c0_26, %c0_27] : memref<8x128xf32, #tpu.memory_space<vmem>>, vector<8x128xf32>
    tpu.vector_store %arg8[%c0_26, %c0_27], %55 {strides = array<i32>} : memref<8x128xf32, #tpu.memory_space<vmem>>, vector<8x128xf32>,
    %c0_i32_28 = arith.constant 0 : i32
    %57 = arith.cmpi eq, %arg1, %c0_i32_28 : i32
    %58 = arith.extui %57 : i1 to i32
    %c0_i32_29 = arith.constant 0 : i32
    %59 = arith.cmpi ne, %58, %c0_i32_29 : i32
    scf.if %59 {
      %c0_30 = arith.constant 0 : index
      %c0_31 = arith.constant 0 : index
      %60 = vector.load %arg8[%c0_30, %c0_31] : memref<8x128xf32, #tpu.memory_space<vmem>>, vector<8x128xf32>
      %c0_32 = arith.constant 0 : index
      %c0_33 = arith.constant 0 : index
      %61 = vector.load %arg6[%c0_32, %c0_33] : memref<1x128xf32, #tpu.memory_space<vmem>>, vector<1x128xf32>
      %62 = vector.broadcast %61 : vector<1x128xf32> to vector<8x128xf32>
      %63 = arith.addf %60, %62 : vector<8x128xf32>
      %c0_34 = arith.constant 0 : index
      %c0_35 = arith.constant 0 : index
      %64 = vector.load %arg7[%c0_34, %c0_35] : memref<8x128xf32, #tpu.memory_space<vmem>>, vector<8x128xf32>
      tpu.vector_store %arg7[%c0_34, %c0_35], %63 {strides = array<i32>} : memref<8x128xf32, #tpu.memory_space<vmem>>, vector<8x128xf32>,
    } else {
    }
    return
  }
  func.func @transform_0(%arg0: i32, %arg1: i32) -> (i32, i32) {
    %c0_i32 = arith.constant 0 : i32
    %c0_i32_0 = arith.constant 0 : i32
    return %arg0, %c0_i32 : i32, i32
  }
  func.func @transform_1(%arg0: i32, %arg1: i32) -> (i32, i32) {
    %c0_i32 = arith.constant 0 : i32
    %c0_i32_0 = arith.constant 0 : i32
    return %c0_i32, %arg1 : i32, i32
  }
  func.func @transform_2(%arg0: i32, %arg1: i32) -> (i32, i32) {
    %c0_i32 = arith.constant 0 : i32
    %c0_i32_0 = arith.constant 0 : i32
    return %c0_i32, %arg1 : i32, i32
  }
  func.func @transform_3(%arg0: i32, %arg1: i32) -> (i32, i32) {
    %c0_i32 = arith.constant 0 : i32
    %c0_i32_0 = arith.constant 0 : i32
    return %arg1, %c0_i32 : i32, i32
  }
  func.func @transform_4(%arg0: i32, %arg1: i32) -> (i32, i32) {
    %c0_i32 = arith.constant 0 : i32
    %c0_i32_0 = arith.constant 0 : i32
    %c0_i32_1 = arith.constant 0 : i32
    return %c0_i32, %c0_i32_0 : i32, i32
  }
  func.func @transform_5(%arg0: i32, %arg1: i32) -> (i32, i32) {
    %c0_i32 = arith.constant 0 : i32
    %c0_i32_0 = arith.constant 0 : i32
    return %arg0, %c0_i32 : i32, i32
  }
}

</mosaic_0001>

<llo_original>
// kernel: tpu_custom_call.1
$region0: #{tpu_custom_call.1}
  #allocation0 [shape = 'u32[]', space=smem, size = 0x4, offset = 0x4, fixed_abs, tag = 'smem constant byte address 0x4 - core index']
  #allocation1 [shape = 'u32[144,128]{1,0:T(1,128)}', space=vmem, size = 0x12000, scoped, tag = 'internal scratch']
  #allocation2 [shape = 'f32[8,128]{1,0:T(8,128)}', space=vmem, size = 0x1000, scoped, tag = 'scratch operand']
  %s0 = inlined_call_operand.hbm [shape: f32[16,128], index: 0, kind: input, shape index: {}]
  %s1 = inlined_call_operand.hbm [shape: f32[128,256], index: 1, kind: input, shape index: {}]
  %s2 = inlined_call_operand.vmem [shape: f32[1,256], index: 2, kind: input, shape index: {}]
  %s3 = inlined_call_operand.hbm [shape: f32[256,128], index: 3, kind: input, shape index: {}]
  %s4 = inlined_call_operand.vmem [shape: f32[1,128], index: 4, kind: input, shape index: {}]
  %s5 = inlined_call_operand.hbm [shape: f32[16,128], index: 5, kind: output, shape index: {}]
  %s6 = sld [smem:[#allocation0]]
  $region73: #{tpu_custom_call.1} parent=0
    _
  %s8 = ssub.s32 1, %s6
  %s9 = scalar_select 0, %s8, %s6
  $region1: #{tpu_custom_call.1} parent=0
    #allocation3 [shape = 'u8[8192]{0}', space=vmem, size = 0x2000, scoped, tag = 'input window, operand 0']
    #allocation4 [shape = 's32[2]{0}', space=sflag, size = 0x8, scoped, tag = 'scoped memory for tpu_custom_call.1']
    #allocation5 [shape = 's32[2]{0}', space=sflag, size = 0x8, scoped, tag = 'scoped memory for tpu_custom_call.1']
    #allocation6 [shape = 'u8[131072]{0}', space=vmem, size = 0x20000, scoped, tag = 'input window, operand 1, single buffered']
    #allocation7 [shape = 's32[1]{0}', space=sflag, size = 0x4, scoped, tag = 'scoped memory for tpu_custom_call.1']
    #allocation8 [shape = 'u8[131072]{0}', space=vmem, size = 0x20000, scoped, tag = 'input window, operand 3, single buffered']
    #allocation9 [shape = 'u8[8192]{0}', space=vmem, size = 0x2000, scoped, tag = 'output window, operand 0']
    %10 = vsyncpa [#allocation4], 0
    %s11 = scalar_lea.sflag [#allocation4], 1
    %12 = vsyncpa %s11, 0
    %13 = vsyncpa [#allocation7], 0
    %14 = vsyncpa [#allocation5], 0
    %s15 = scalar_lea.sflag [#allocation5], 1
    %16 = vsyncpa %s15, 0
    loop: start=0, step=1, limit=4
    $region2: #{tpu_custom_call.1} parent=1 // loop_pre_header
      _
    $region3: #{tpu_custom_call.1} parent=1 // loop_header
      %s18 = sphi 0, %s22
      %p19 = scmp.ge.s32.totalorder %s18, 4
      %s25 = sphi 0, %s37
      %s26 = sphi 0, %s33
      %s27 = sphi 0, %s25
      %s28 = sphi 0, %s26
      %s29 = sphi 0, %s27
      %s30 = sphi 0, %s28
      %s40 = sphi 0, %s42
      %s43 = sphi 0, %s40
      %s44 = sphi 0, %s43
      %s60 = sphi 0, %s44
      %s66 = sphi 0, %s68
      %s69 = sphi 0, %s66
      %s70 = sphi 0, %s69
      %s86 = sphi 0, %s70
      %s92 = sphi 0, %s94
      %s95 = sphi 0, %s92
      %s96 = sphi 0, %s95
      %s112 = sphi 0, %s96
      %s118 = sphi 0, %s120
      %s121 = sphi 0, %s118
      %s122 = sphi 0, %s121
      %s138 = sphi 0, %s122
      %s142 = sphi 0, %s142
      %s144 = sphi 0, %s142
      %s145 = sphi 0, %s144
      %s159 = sphi 0, %s145
      %s165 = sphi 0, %s167
      %s168 = sphi 0, %s165
      %s169 = sphi 0, %s168
      %s185 = sphi 0, %s169
    $region4: #{tpu_custom_call.1} parent=1 // loop_header_branch
      %21 = sbr.rel (%p19) target = $region8
    $region5: #{tpu_custom_call.1} parent=1 // loop_body
      %s23 = ssub.s32 %s18, 1
      %s24 = ssub.s32 %s18, 2
      %s31 = sadd.s32 1, %s26
      %p32 = scmp.ge.s32.totalorder %s31, 1
      %s33 = scalar_select %p32, 0, %s31
      %s34 = sadd.s32 1, %s25
      %s35 = scalar_select %p32, %s34, %s25
      %p36 = scmp.ge.s32.totalorder %s35, 2
      %s37 = scalar_select %p36, 0, %s35
      %s38 = ssub.s32 %s25, %s37
      %p39 = scmp.eq.s32.totalorder %s38, 0
      %s41 = sadd.s32 %s40, 1
      %s42 = scalar_select %p39, %s40, %s41
      %p45 = pneg %p39
      %p46 = scmp.eq.s32.totalorder %s18, 1
      %p47 = por %p45, %p46
      %p48 = scmp.ne.s32.totalorder %s40, %s43
      %p49 = scmp.eq.s32.totalorder %s18, 0
      %p50 = por %p48, %p49
      %p51 = scmp.ne.s32.totalorder %s40, %s43
      %p52 = scmp.eq.s32.totalorder %s23, 1
      %p53 = por %p51, %p52
      %p54 = scmp.ne.s32.totalorder %s43, %s44
      %p55 = scmp.eq.s32.totalorder %s23, 0
      %p56 = por %p54, %p55
      %p57 = scmp.ne.s32.totalorder %s43, %s44
      %p58 = scmp.eq.s32.totalorder %s24, 1
      %p59 = por %p57, %p58
      %p61 = scmp.ne.s32.totalorder %s44, %s60
      %p62 = scmp.eq.s32.totalorder %s24, 0
      %p63 = por %p61, %p62
      %s64 = ssub.s32 %s26, %s33
      %p65 = scmp.eq.s32.totalorder %s64, 0
      %s67 = sadd.s32 %s66, 1
      %s68 = scalar_select %p65, %s66, %s67
      %p71 = pneg %p65
      %p72 = scmp.eq.s32.totalorder %s18, 1
      %p73 = por %p71, %p72
      %p74 = scmp.ne.s32.totalorder %s66, %s69
      %p75 = scmp.eq.s32.totalorder %s18, 0
      %p76 = por %p74, %p75
      %p77 = scmp.ne.s32.totalorder %s66, %s69
      %p78 = scmp.eq.s32.totalorder %s23, 1
      %p79 = por %p77, %p78
      %p80 = scmp.ne.s32.totalorder %s69, %s70
      %p81 = scmp.eq.s32.totalorder %s23, 0
      %p82 = por %p80, %p81
      %p83 = scmp.ne.s32.totalorder %s69, %s70
      %p84 = scmp.eq.s32.totalorder %s24, 1
      %p85 = por %p83, %p84
      %p87 = scmp.ne.s32.totalorder %s70, %s86
      %p88 = scmp.eq.s32.totalorder %s24, 0
      %p89 = por %p87, %p88
      %s90 = ssub.s32 %s26, %s33
      %p91 = scmp.eq.s32.totalorder %s90, 0
      %s93 = sadd.s32 %s92, 1
      %s94 = scalar_select %p91, %s92, %s93
      %p97 = pneg %p91
      %p98 = scmp.eq.s32.totalorder %s18, 1
      %p99 = por %p97, %p98
      %p100 = scmp.ne.s32.totalorder %s92, %s95
      %p101 = scmp.eq.s32.totalorder %s18, 0
      %p102 = por %p100, %p101
      %p103 = scmp.ne.s32.totalorder %s92, %s95
      %p104 = scmp.eq.s32.totalorder %s23, 1
      %p105 = por %p103, %p104
      %p106 = scmp.ne.s32.totalorder %s95, %s96
      %p107 = scmp.eq.s32.totalorder %s23, 0
      %p108 = por %p106, %p107
      %p109 = scmp.ne.s32.totalorder %s95, %s96
      %p110 = scmp.eq.s32.totalorder %s24, 1
      %p111 = por %p109, %p110
      %p113 = scmp.ne.s32.totalorder %s96, %s112
      %p114 = scmp.eq.s32.totalorder %s24, 0
      %p115 = por %p113, %p114
      %s116 = ssub.s32 %s26, %s33
      %p117 = scmp.eq.s32.totalorder %s116, 0
      %s119 = sadd.s32 %s118, 1
      %s120 = scalar_select %p117, %s118, %s119
      %p123 = pneg %p117
      %p124 = scmp.eq.s32.totalorder %s18, 1
      %p125 = por %p123, %p124
      %p126 = scmp.ne.s32.totalorder %s118, %s121
      %p127 = scmp.eq.s32.totalorder %s18, 0
      %p128 = por %p126, %p127
      %p129 = scmp.ne.s32.totalorder %s118, %s121
      %p130 = scmp.eq.s32.totalorder %s23, 1
      %p131 = por %p129, %p130
      %p132 = scmp.ne.s32.totalorder %s121, %s122
      %p133 = scmp.eq.s32.totalorder %s23, 0
      %p134 = por %p132, %p133
      %p135 = scmp.ne.s32.totalorder %s121, %s122
      %p136 = scmp.eq.s32.totalorder %s24, 1
      %p137 = por %p135, %p136
      %p139 = scmp.ne.s32.totalorder %s122, %s138
      %p140 = scmp.eq.s32.totalorder %s24, 0
      %p141 = por %p139, %p140
      %s143 = sadd.s32 %s142, 1
      %p146 = scmp.eq.s32.totalorder %s18, 1
      %p147 = scmp.ne.s32.totalorder %s142, %s144
      %p148 = scmp.eq.s32.totalorder %s18, 0
      %p149 = por %p147, %p148
      %p150 = scmp.ne.s32.totalorder %s142, %s144
      %p151 = scmp.eq.s32.totalorder %s23, 1
      %p152 = por %p150, %p151
      %p153 = scmp.ne.s32.totalorder %s144, %s145
      %p154 = scmp.eq.s32.totalorder %s23, 0
      %p155 = por %p153, %p154
      %p156 = scmp.ne.s32.totalorder %s144, %s145
      %p157 = scmp.eq.s32.totalorder %s24, 1
      %p158 = por %p156, %p157
      %p160 = scmp.ne.s32.totalorder %s145, %s159
      %p161 = scmp.eq.s32.totalorder %s24, 0
      %p162 = por %p160, %p161
      %s163 = ssub.s32 %s25, %s37
      %p164 = scmp.eq.s32.totalorder %s163, 0
      %s166 = sadd.s32 %s165, 1
      %s167 = scalar_select %p164, %s165, %s166
      %p170 = pneg %p164
      %p171 = scmp.eq.s32.totalorder %s18, 1
      %p172 = por %p170, %p171
      %p173 = scmp.ne.s32.totalorder %s165, %s168
      %p174 = scmp.eq.s32.totalorder %s18, 0
      %p175 = por %p173, %p174
      %p176 = scmp.ne.s32.totalorder %s165, %s168
      %p177 = scmp.eq.s32.totalorder %s23, 1
      %p178 = por %p176, %p177
      %p179 = scmp.ne.s32.totalorder %s168, %s169
      %p180 = scmp.eq.s32.totalorder %s23, 0
      %p181 = por %p179, %p180
      %p182 = scmp.ne.s32.totalorder %s168, %s169
      %p183 = scmp.eq.s32.totalorder %s24, 1
      %p184 = por %p182, %p183
      %p186 = scmp.ne.s32.totalorder %s169, %s185
      %p187 = scmp.eq.s32.totalorder %s24, 0
      %p188 = por %p186, %p187
      %p189 = scmp.le.s32.totalorder 1, %s18
      %p190 = scmp.lt.s32.totalorder %s18, 3
      %p191 = pnand %p189, %p190
      %p192 = pneg %p191
      // Predicated region
      $region9: #{tpu_custom_call.1} parent=5 // pred_check
        _
      $region10: #{tpu_custom_call.1} parent=5 // pred_check_branch
        %194 = sbr.rel (%p191) target = $region12
      $region11: #{tpu_custom_call.1} parent=5 // pred_region
        %s195 = ssub.s32 %s18, 1
        // Predicated region
        $region13: #{tpu_custom_call.1} parent=11 // pred_check
          %p196 = pneg %p82
        $region14: #{tpu_custom_call.1} parent=11 // pred_check_branch
          %198 = sbr.rel (%p196) target = $region16
        $region15: #{tpu_custom_call.1} parent=11 // pred_region
          %s199 = smul.u32 2, %s28
          %s201 = ssub.s32 4096, 4096
          %202 = vsyncadd [#allocation7], %s201
          %s203 = smul.addr %s199, 128
          %s204 = scalar_lea.hbm %s1, %s203
          %s205 = sshll.u32 [#allocation6], 4
          %s206 = int_to_ptr.vmem [resolvable:$true] %s205
          %211 = dma.hbm_to_vmem [thread:$0]  %s204, 4096, %s206, [#allocation7], 256, 256, 16
        $region16: #{tpu_custom_call.1} parent=11 // pred_fallthru
          _
        // Predicated region
        $region17: #{tpu_custom_call.1} parent=11 // pred_check
          %p212 = pneg %p108
        $region18: #{tpu_custom_call.1} parent=11 // pred_check_branch
          %214 = sbr.rel (%p212) target = $region20
        $region19: #{tpu_custom_call.1} parent=11 // pred_region
          %s215 = smul.u32 2, %s28
          %p216 = scmp.lt.s32.totalorder %s215, 1
          %s217 = scalar_select %p216, %s215, 1
          %s218 = scalar_lea.vmem %s2, %s217
          %s219 = smul.u32 2, %s28
        $region20: #{tpu_custom_call.1} parent=11 // pred_fallthru
          _
        // Predicated region
        $region21: #{tpu_custom_call.1} parent=11 // pred_check
          %p220 = pneg %p134
        $region22: #{tpu_custom_call.1} parent=11 // pred_check_branch
          %222 = sbr.rel (%p220) target = $region24
        $region23: #{tpu_custom_call.1} parent=11 // pred_region
          %s223 = smul.u32 32, %s28
          %s225 = ssub.s32 4096, 4096
          %226 = vsyncadd [#allocation7], %s225
          %s227 = smul.addr %s223, 128
          %s228 = scalar_lea.hbm %s3, %s227
          %s229 = sshll.u32 [#allocation8], 4
          %s230 = int_to_ptr.vmem [resolvable:$true] %s229
          %235 = dma.hbm_to_vmem [thread:$0]  %s228, 4096, %s230, [#allocation7], 128, 128, 8
        $region24: #{tpu_custom_call.1} parent=11 // pred_fallthru
          _
        // Predicated region
        $region25: #{tpu_custom_call.1} parent=11 // pred_check
          %p236 = pneg %p155
        $region26: #{tpu_custom_call.1} parent=11 // pred_check_branch
          %238 = sbr.rel (%p236) target = $region28
        $region27: #{tpu_custom_call.1} parent=11 // pred_region
          _
        $region28: #{tpu_custom_call.1} parent=11 // pred_fallthru
          _
      $region12: #{tpu_custom_call.1} parent=5 // pred_fallthru
        _
      %p239 = scmp.lt.s32.totalorder %s18, 2
      // Predicated region
      $region29: #{tpu_custom_call.1} parent=5 // pred_check
        %p240 = pneg %p239
      $region30: #{tpu_custom_call.1} parent=5 // pred_check_branch
        %242 = sbr.rel (%p240) target = $region32
      $region31: #{tpu_custom_call.1} parent=5 // pred_region
        // Predicated region
        $region33: #{tpu_custom_call.1} parent=31 // pred_check
          %p243 = pneg %p50
        $region34: #{tpu_custom_call.1} parent=31 // pred_check_branch
          %245 = sbr.rel (%p243) target = $region36
        $region35: #{tpu_custom_call.1} parent=31 // pred_region
          %s246 = sand.u32 %s40, 1
          %s247 = scalar_lea.sflag [#allocation4], %s246
          %s248 = sand.u32 %s40, 1
          %s249 = smul.addr %s248, 8
          %s250 = scalar_lea.vmem [#allocation3], %s249
          %s252 = ssub.s32 128, 128
          %253 = vsyncadd %s247, %s252
          %s254 = smul.addr %s25, 128
          %s255 = scalar_lea.hbm %s0, %s254
          %s257 = sshll.u32 %s250, 4
          %s258 = int_to_ptr.vmem [resolvable:$true] %s257
          %260 = dma.hbm_to_vmem [thread:$0]  %s255, 128, %s258, %s247
        $region36: #{tpu_custom_call.1} parent=31 // pred_fallthru
          _
      $region32: #{tpu_custom_call.1} parent=5 // pred_fallthru
        _
      %p261 = scmp.le.s32.totalorder 1, %s18
      %p262 = scmp.lt.s32.totalorder %s18, 3
      %p263 = pnand %p261, %p262
      %p264 = pneg %p263
      // Predicated region
      $region37: #{tpu_custom_call.1} parent=5 // pred_check
        _
      $region38: #{tpu_custom_call.1} parent=5 // pred_check_branch
        %266 = sbr.rel (%p263) target = $region40
      $region39: #{tpu_custom_call.1} parent=5 // pred_region
        %s267 = ssub.s32 %s18, 1
        %s268 = sand.u32 %s43, 1
        %s269 = scalar_lea.sflag [#allocation4], %s268
        %s270 = sand.u32 %s43, 1
        %s271 = smul.addr %s270, 8
        %s272 = scalar_lea.vmem [#allocation3], %s271
        // Predicated region
        $region41: #{tpu_custom_call.1} parent=39 // pred_check
          %p273 = pneg %p56
        $region42: #{tpu_custom_call.1} parent=39 // pred_check_branch
          %275 = sbr.rel (%p273) target = $region44
        $region43: #{tpu_custom_call.1} parent=39 // pred_region
          %276 = dma.done %s269, 128
        $region44: #{tpu_custom_call.1} parent=39 // pred_fallthru
          _
        // Predicated region
        $region45: #{tpu_custom_call.1} parent=39 // pred_check
          %p277 = pneg %p82
        $region46: #{tpu_custom_call.1} parent=39 // pred_check_branch
          %279 = sbr.rel (%p277) target = $region48
        $region47: #{tpu_custom_call.1} parent=39 // pred_region
          %280 = dma.done [#allocation7], 4096
        $region48: #{tpu_custom_call.1} parent=39 // pred_fallthru
          _
        // Predicated region
        $region49: #{tpu_custom_call.1} parent=39 // pred_check
          %p281 = pneg %p134
        $region50: #{tpu_custom_call.1} parent=39 // pred_check_branch
          %283 = sbr.rel (%p281) target = $region52
        $region51: #{tpu_custom_call.1} parent=39 // pred_region
          %284 = dma.done [#allocation7], 4096
        $region52: #{tpu_custom_call.1} parent=39 // pred_fallthru
          _
        %s285 = sand.u32 %s43, 1
        %s286 = scalar_lea.sflag [#allocation4], %s285
        %s287 = sand.u32 %s43, 1
        %s288 = smul.addr %s287, 8
        %s289 = scalar_lea.vmem [#allocation3], %s288
        %p290 = pneg %p56
        %p291 = pneg %p53
        %p292 = pneg %p82
        %p293 = pneg %p79
        %s294 = smul.u32 2, %s28
        %p295 = scmp.lt.s32.totalorder %s294, 1
        %s296 = scalar_select %p295, %s294, 1
        %s297 = scalar_lea.vmem %s2, %s296
        %p298 = pneg %p108
        %p299 = pneg %p105
        %p300 = pneg %p134
        %p301 = pneg %p131
        %p302 = pneg %p155
        %p303 = pneg %p152
        %p304 = pneg %p181
        %p305 = pneg %p178
        %s306 = sand.u32 %s168, 1
        %s307 = scalar_lea.sflag [#allocation5], %s306
        %s308 = sand.u32 %s168, 1
        %s309 = smul.addr %s308, 8
        %s310 = scalar_lea.vmem [#allocation9], %s309
        %s311 = smul.u32 2, %s28
        %s312 = smul.u32 2, %s28
        %p313 = scmp.lt.s32.totalorder %s312, 1
        %s314 = scalar_select %p313, %s312, 1
        %s315 = scalar_lea.vmem %s2, %s314
        %s316 = smul.u32 2, %s28
        %s317 = smul.u32 32, %s28
        %p318 = scmp.eq.s32.totalorder %s28, 0
        // Predicated region
        $region53: #{tpu_custom_call.1} parent=39 // pred_check
          %p319 = pneg %p318
        $region54: #{tpu_custom_call.1} parent=39 // pred_check_branch
          %321 = sbr.rel (%p319) target = $region56
        $region55: #{tpu_custom_call.1} parent=39 // pred_region
          %322 = vst [vmem:[#allocation2] sm:$0xff] 0.0
        $region56: #{tpu_custom_call.1} parent=39 // pred_fallthru
          _
        %v323 = vld [vmem:[%s272] sm:$0xff]
        %v324 = vld [vmem:[#allocation6] sm:$0xff]
        %v325 = vld [vmem:[#allocation6 + $0x8] sm:$0xff]
        %v326 = vld [vmem:[#allocation6 + $0x10] sm:$0xff]
        %v327 = vld [vmem:[#allocation6 + $0x18] sm:$0xff]
        %v328 = vld [vmem:[#allocation6 + $0x20] sm:$0xff]
        %v329 = vld [vmem:[#allocation6 + $0x28] sm:$0xff]
        %v330 = vld [vmem:[#allocation6 + $0x30] sm:$0xff]
        %v331 = vld [vmem:[#allocation6 + $0x38] sm:$0xff]
        %v332 = vld [vmem:[#allocation6 + $0x40] sm:$0xff]
        %v333 = vld [vmem:[#allocation6 + $0x48] sm:$0xff]
        %v334 = vld [vmem:[#allocation6 + $0x50] sm:$0xff]
        %v335 = vld [vmem:[#allocation6 + $0x58] sm:$0xff]
        %v336 = vld [vmem:[#allocation6 + $0x60] sm:$0xff]
        %v337 = vld [vmem:[#allocation6 + $0x68] sm:$0xff]
        %v338 = vld [vmem:[#allocation6 + $0x70] sm:$0xff]
        %v339 = vld [vmem:[#allocation6 + $0x78] sm:$0xff]
        %v340 = vld [vmem:[#allocation6 + $0x80] sm:$0xff]
        %v341 = vld [vmem:[#allocation6 + $0x88] sm:$0xff]
        %v342 = vld [vmem:[#allocation6 + $0x90] sm:$0xff]
        %v343 = vld [vmem:[#allocation6 + $0x98] sm:$0xff]
        %v344 = vld [vmem:[#allocation6 + $0xa0] sm:$0xff]
        %v345 = vld [vmem:[#allocation6 + $0xa8] sm:$0xff]
        %v346 = vld [vmem:[#allocation6 + $0xb0] sm:$0xff]
        %v347 = vld [vmem:[#allocation6 + $0xb8] sm:$0xff]
        %v348 = vld [vmem:[#allocation6 + $0xc0] sm:$0xff]
        %v349 = vld [vmem:[#allocation6 + $0xc8] sm:$0xff]
        %v350 = vld [vmem:[#allocation6 + $0xd0] sm:$0xff]
        %v351 = vld [vmem:[#allocation6 + $0xd8] sm:$0xff]
        %v352 = vld [vmem:[#allocation6 + $0xe0] sm:$0xff]
        %v353 = vld [vmem:[#allocation6 + $0xe8] sm:$0xff]
        %v354 = vld [vmem:[#allocation6 + $0xf0] sm:$0xff]
        %v355 = vld [vmem:[#allocation6 + $0xf8] sm:$0xff]
        %v356 = vld [vmem:[%s315] sm:$0x3]
        %v358 = vlaneseq
        %v359 = vshrl.u32 %v358, 7
        %v360 = vsub.s32 0, %v359
        %v361 = vrot.slane %v356, %v360
        %v362 = vlaneseq
        %v363 = vshrl.u32 %v362, 7
        %v364 = vsub.s32 1, %v363
        %v365 = vrot.slane %v356, %v364
        %368 = vmatprep.subr.mxu0 %v355
        %369 = vmatpush1.msra.mxu0 %v354
        %370 = vmatprep.subr.mxu0 %v353
        %371 = vmatpush1.msra.mxu0 %v352
        %372 = vmatprep.subr.mxu0 %v351
        %373 = vmatpush1.msra.mxu0 %v350
        %374 = vmatprep.subr.mxu0 %v349
        %375 = vmatpush1.msra.mxu0 %v348
        %376 = vmatprep.subr.mxu0 %v347
        %377 = vmatpush1.msra.mxu0 %v346
        %378 = vmatprep.subr.mxu0 %v345
        %379 = vmatpush1.msra.mxu0 %v344
        %380 = vmatprep.subr.mxu0 %v343
        %381 = vmatpush1.msra.mxu0 %v342
        %382 = vmatprep.subr.mxu0 %v341
        %383 = vmatpush1.msra.mxu0 %v340
        %384 = vmatprep.subr.mxu0 %v339
        %385 = vmatpush1.msra.mxu0 %v338
        %386 = vmatprep.subr.mxu0 %v337
        %387 = vmatpush1.msra.mxu0 %v336
        %388 = vmatprep.subr.mxu0 %v335
        %389 = vmatpush1.msra.mxu0 %v334
        %390 = vmatprep.subr.mxu0 %v333
        %391 = vmatpush1.msra.mxu0 %v332
        %392 = vmatprep.subr.mxu0 %v331
        %393 = vmatpush1.msra.mxu0 %v330
        %394 = vmatprep.subr.mxu0 %v329
        %395 = vmatpush1.msra.mxu0 %v328
        %396 = vmatprep.subr.mxu0 %v327
        %397 = vmatpush1.msra.mxu0 %v326
        %398 = vmatprep.subr.mxu0 %v325
        %399 = vmatpush1.msra.mxu0 %v324
        %400 = vmatprep.subr.mxu0 0.0
        %401 = vmatpush2.msra.mxu0 0.0
        %402 = vmatprep.subr.mxu0 0.0
        %403 = vmatpush2.msra.mxu0 0.0
        %404 = vmatprep.subr.mxu0 0.0
        %405 = vmatpush2.msra.mxu0 0.0
        %406 = vmatprep.subr.mxu0 0.0
        %407 = vmatpush2.msra.mxu0 0.0
        %408 = vmatprep.subr.mxu0 0.0
        %409 = vmatpush2.msra.mxu0 0.0
        %410 = vmatprep.subr.mxu0 0.0
        %411 = vmatpush2.msra.mxu0 0.0
        %412 = vmatprep.subr.mxu0 0.0
        %413 = vmatpush2.msra.mxu0 0.0
        %414 = vmatprep.subr.mxu0 0.0
        %415 = vmatpush2.msra.mxu0 0.0
        %416 = vmatprep.subr.mxu0 0.0
        %417 = vmatpush2.msra.mxu0 0.0
        %418 = vmatprep.subr.mxu0 0.0
        %419 = vmatpush2.msra.mxu0 0.0
        %420 = vmatprep.subr.mxu0 0.0
        %421 = vmatpush2.msra.mxu0 0.0
        %422 = vmatprep.subr.mxu0 0.0
        %423 = vmatpush2.msra.mxu0 0.0
        %424 = vmatprep.subr.mxu0 0.0
        %425 = vmatpush2.msra.mxu0 0.0
        %426 = vmatprep.subr.mxu0 0.0
        %427 = vmatpush2.msra.mxu0 0.0
        %428 = vmatprep.subr.mxu0 0.0
        %429 = vmatpush2.msra.mxu0 0.0
        %430 = vmatprep.subr.mxu0 0.0
        %431 = vmatpush2.msra.mxu0 0.0
        %432 = vmatprep.mubr.f32.mxu0 0.0
        %433 = vmatmul.mubr.f32.gmra.mxu0 %v323
        %v434 = vpop.f32.mrf.mxu0
        %v435 = vadd.f32 %v361, %v434
        %v436 = vpop.f32.mrf.mxu0
        %v437 = vadd.f32 %v365, %v436
        %438 = vdwg.mxu0
        %v439 = vmul.f32 %v435, 0.5
        %v440 = vmul.f32 %v437, 0.5
        %v441 = vmul.f32 %v435, 0.70710677
        %v442 = vmul.f32 %v437, 0.70710677
        %v443 = vand.u32 2147483647, %v441
        %v444 = vand.u32 2147483647, %v442
        %v445 = vmul.f32 %v443, 0.3275911
        %v446 = vmul.f32 %v444, 0.3275911
        %v447 = vadd.f32 %v445, 1.0
        %v448 = vadd.f32 %v446, 1.0
        %v449 = vrcp.pop %v447
        %v450 = vrcp.pop %v448
        %v451 = vmul.f32 %v447, %v449
        %v452 = vmul.f32 %v448, %v450
        %v453 = vsub.f32 2.0, %v451
        %v454 = vsub.f32 2.0, %v452
        %v455 = vmul.f32 %v449, %v453
        %v456 = vmul.f32 %v450, %v454
        %v457 = vmul.f32 %v455, 1.0614054
        %v458 = vmul.f32 %v456, 1.0614054
        %v459 = vadd.f32 %v457, -1.4531521
        %v460 = vadd.f32 %v458, -1.4531521
        %v461 = vmul.f32 %v459, %v455
        %v462 = vmul.f32 %v460, %v456
        %v463 = vadd.f32 %v461, 1.4214138
        %v464 = vadd.f32 %v462, 1.4214138
        %v465 = vmul.f32 %v463, %v455
        %v466 = vmul.f32 %v464, %v456
        %v467 = vadd.f32 %v465, -0.28449672
        %v468 = vadd.f32 %v466, -0.28449672
        %v469 = vmul.f32 %v467, %v455
        %v470 = vmul.f32 %v468, %v456
        %v471 = vadd.f32 %v469, 0.2548296
        %v472 = vadd.f32 %v470, 0.2548296
        %v473 = vmul.f32 %v471, %v455
        %v474 = vmul.f32 %v472, %v456
        %v475 = vsub.f32 0.0, %v443
        %v476 = vsub.f32 0.0, %v444
        %v477 = vmul.f32 %v475, %v443
        %v478 = vmul.f32 %v476, %v444
        %v479 = vmul.f32 %v477, 1.442695
        %v480 = vpow.pop %v479
        %v481 = vmul.f32 %v478, 1.442695
        %v482 = vpow.pop %v481
        %v483 = vmul.f32 %v473, %v480
        %v484 = vmul.f32 %v474, %v482
        %v485 = vsub.f32 1.0, %v483
        %v486 = vsub.f32 1.0, %v484
        %vm487 = vcmp.ge.f32.partialorder %v441, 0.0
        %vm488 = vcmp.ge.f32.partialorder %v442, 0.0
        %v489 = vsub.f32 0.0, %v485
        %v490 = vsub.f32 0.0, %v486
        %v491 = vsel %vm487, %v485, %v489
        %v492 = vsel %vm488, %v486, %v490
        %v493 = vadd.f32 %v491, 1.0
        %v494 = vadd.f32 %v492, 1.0
        %v495 = vmul.f32 %v439, %v493
        %v496 = vmul.f32 %v440, %v494
        %v497 = vld [vmem:[#allocation2] sm:$0xff]
        %v498 = vld [vmem:[#allocation8] sm:$0xff]
        %v499 = vld [vmem:[#allocation8 + $0x8] sm:$0xff]
        %v500 = vld [vmem:[#allocation8 + $0x10] sm:$0xff]
        %v501 = vld [vmem:[#allocation8 + $0x18] sm:$0xff]
        %v502 = vld [vmem:[#allocation8 + $0x20] sm:$0xff]
        %v503 = vld [vmem:[#allocation8 + $0x28] sm:$0xff]
        %v504 = vld [vmem:[#allocation8 + $0x30] sm:$0xff]
        %v505 = vld [vmem:[#allocation8 + $0x38] sm:$0xff]
        %v506 = vld [vmem:[#allocation8 + $0x40] sm:$0xff]
        %v507 = vld [vmem:[#allocation8 + $0x48] sm:$0xff]
        %v508 = vld [vmem:[#allocation8 + $0x50] sm:$0xff]
        %v509 = vld [vmem:[#allocation8 + $0x58] sm:$0xff]
        %v510 = vld [vmem:[#allocation8 + $0x60] sm:$0xff]
        %v511 = vld [vmem:[#allocation8 + $0x68] sm:$0xff]
        %v512 = vld [vmem:[#allocation8 + $0x70] sm:$0xff]
        %v513 = vld [vmem:[#allocation8 + $0x78] sm:$0xff]
        %v514 = vld [vmem:[#allocation8 + $0x80] sm:$0xff]
        %v515 = vld [vmem:[#allocation8 + $0x88] sm:$0xff]
        %v516 = vld [vmem:[#allocation8 + $0x90] sm:$0xff]
        %v517 = vld [vmem:[#allocation8 + $0x98] sm:$0xff]
        %v518 = vld [vmem:[#allocation8 + $0xa0] sm:$0xff]
        %v519 = vld [vmem:[#allocation8 + $0xa8] sm:$0xff]
        %v520 = vld [vmem:[#allocation8 + $0xb0] sm:$0xff]
        %v521 = vld [vmem:[#allocation8 + $0xb8] sm:$0xff]
        %v522 = vld [vmem:[#allocation8 + $0xc0] sm:$0xff]
        %v523 = vld [vmem:[#allocation8 + $0xc8] sm:$0xff]
        %v524 = vld [vmem:[#allocation8 + $0xd0] sm:$0xff]
        %v525 = vld [vmem:[#allocation8 + $0xd8] sm:$0xff]
        %v526 = vld [vmem:[#allocation8 + $0xe0] sm:$0xff]
        %v527 = vld [vmem:[#allocation8 + $0xe8] sm:$0xff]
        %v528 = vld [vmem:[#allocation8 + $0xf0] sm:$0xff]
        %v529 = vld [vmem:[#allocation8 + $0xf8] sm:$0xff]
        %530 = vmatprep.subr.mxu0 0.0
        %531 = vmatpush1.msra.mxu0 %v513
        %532 = vmatprep.subr.mxu0 0.0
        %533 = vmatpush1.msra.mxu0 %v512
        %534 = vmatprep.subr.mxu0 0.0
        %535 = vmatpush1.msra.mxu0 %v511
        %536 = vmatprep.subr.mxu0 0.0
        %537 = vmatpush1.msra.mxu0 %v510
        %538 = vmatprep.subr.mxu0 0.0
        %539 = vmatpush1.msra.mxu0 %v509
        %540 = vmatprep.subr.mxu0 0.0
        %541 = vmatpush1.msra.mxu0 %v508
        %542 = vmatprep.subr.mxu0 0.0
        %543 = vmatpush1.msra.mxu0 %v507
        %544 = vmatprep.subr.mxu0 0.0
        %545 = vmatpush1.msra.mxu0 %v506
        %546 = vmatprep.subr.mxu0 0.0
        %547 = vmatpush1.msra.mxu0 %v505
        %548 = vmatprep.subr.mxu0 0.0
        %549 = vmatpush1.msra.mxu0 %v504
        %550 = vmatprep.subr.mxu0 0.0
        %551 = vmatpush1.msra.mxu0 %v503
        %552 = vmatprep.subr.mxu0 0.0
        %553 = vmatpush1.msra.mxu0 %v502
        %554 = vmatprep.subr.mxu0 0.0
        %555 = vmatpush1.msra.mxu0 %v501
        %556 = vmatprep.subr.mxu0 0.0
        %557 = vmatpush1.msra.mxu0 %v500
        %558 = vmatprep.subr.mxu0 0.0
        %559 = vmatpush1.msra.mxu0 %v499
        %560 = vmatprep.subr.mxu0 0.0
        %561 = vmatpush1.msra.mxu0 %v498
        %562 = vmatprep.subr.mxu0 0.0
        %563 = vmatpush2.msra.mxu0 %v529
        %564 = vmatprep.subr.mxu0 0.0
        %565 = vmatpush2.msra.mxu0 %v528
        %566 = vmatprep.subr.mxu0 0.0
        %567 = vmatpush2.msra.mxu0 %v527
        %568 = vmatprep.subr.mxu0 0.0
        %569 = vmatpush2.msra.mxu0 %v526
        %570 = vmatprep.subr.mxu0 0.0
        %571 = vmatpush2.msra.mxu0 %v525
        %572 = vmatprep.subr.mxu0 0.0
        %573 = vmatpush2.msra.mxu0 %v524
        %574 = vmatprep.subr.mxu0 0.0
        %575 = vmatpush2.msra.mxu0 %v523
        %576 = vmatprep.subr.mxu0 0.0
        %577 = vmatpush2.msra.mxu0 %v522
        %578 = vmatprep.subr.mxu0 0.0
        %579 = vmatpush2.msra.mxu0 %v521
        %580 = vmatprep.subr.mxu0 0.0
        %581 = vmatpush2.msra.mxu0 %v520
        %582 = vmatprep.subr.mxu0 0.0
        %583 = vmatpush2.msra.mxu0 %v519
        %584 = vmatprep.subr.mxu0 0.0
        %585 = vmatpush2.msra.mxu0 %v518
        %586 = vmatprep.subr.mxu0 0.0
        %587 = vmatpush2.msra.mxu0 %v517
        %588 = vmatprep.subr.mxu0 0.0
        %589 = vmatpush2.msra.mxu0 %v516
        %590 = vmatprep.subr.mxu0 0.0
        %591 = vmatpush2.msra.mxu0 %v515
        %592 = vmatprep.subr.mxu0 0.0
        %593 = vmatpush2.msra.mxu0 %v514
        %594 = vmatprep.mubr.f32.mxu0 %v496
        %595 = vmatmul.mubr.f32.gmra.mxu0 %v495
        %v596 = vpop.f32.mrf.mxu0
        %v597 = vadd.f32 0.0, %v596
        %v598 = vpop.f32.mrf.mxu0
        %599 = vdwg.mxu0
        %v600 = vadd.f32 %v497, %v597
        %601 = vst [vmem:[#allocation2] sm:$0xff] %v600
        // Predicated region
        $region57: #{tpu_custom_call.1} parent=39 // pred_check
          %p602 = pneg %p318
        $region58: #{tpu_custom_call.1} parent=39 // pred_check_branch
          %604 = sbr.rel (%p602) target = $region60
        $region59: #{tpu_custom_call.1} parent=39 // pred_region
          %v605 = vld [vmem:[#allocation2] sm:$0xff]
          %v606 = vld [vmem:[%s4] sm:$0x1]
          %v608 = vlaneseq
          %v609 = vshrl.u32 %v608, 7
          %v610 = vsub.s32 0, %v609
          %v611 = vrot.slane %v606, %v610
          %v613 = vadd.f32 %v605, %v611
          %614 = vst [vmem:[%s310] sm:$0xff] %v613
        $region60: #{tpu_custom_call.1} parent=39 // pred_fallthru
          _
        %s615 = sand.u32 %s168, 1
        %s616 = scalar_lea.sflag [#allocation5], %s615
        %s617 = sand.u32 %s168, 1
        %s618 = smul.addr %s617, 8
        %s619 = scalar_lea.vmem [#allocation9], %s618
        // Predicated region
        $region61: #{tpu_custom_call.1} parent=39 // pred_check
          %p620 = pneg %p178
        $region62: #{tpu_custom_call.1} parent=39 // pred_check_branch
          %622 = sbr.rel (%p620) target = $region64
        $region63: #{tpu_custom_call.1} parent=39 // pred_region
          %s624 = ssub.s32 128, 128
          %625 = vsyncadd %s616, %s624
          %s626 = smul.addr %s27, 128
          %s627 = scalar_lea.hbm %s5, %s626
          %s629 = sshll.u32 %s619, 4
          %s630 = int_to_ptr.vmem [resolvable:$true] %s629
          %632 = dma.vmem_to_hbm [thread:$0]  %s630, 128, %s627, %s616
        $region64: #{tpu_custom_call.1} parent=39 // pred_fallthru
          _
      $region40: #{tpu_custom_call.1} parent=5 // pred_fallthru
        _
      %p633 = scmp.le.s32.totalorder 2, %s18
      // Predicated region
      $region65: #{tpu_custom_call.1} parent=5 // pred_check
        %p634 = pneg %p633
      $region66: #{tpu_custom_call.1} parent=5 // pred_check_branch
        %636 = sbr.rel (%p634) target = $region68
      $region67: #{tpu_custom_call.1} parent=5 // pred_region
        %s637 = ssub.s32 %s18, 2
        // Predicated region
        $region69: #{tpu_custom_call.1} parent=67 // pred_check
          %p638 = pneg %p184
        $region70: #{tpu_custom_call.1} parent=67 // pred_check_branch
          %640 = sbr.rel (%p638) target = $region72
        $region71: #{tpu_custom_call.1} parent=67 // pred_region
          %s641 = sand.u32 %s169, 1
          %s642 = scalar_lea.sflag [#allocation5], %s641
          %s643 = sand.u32 %s169, 1
          %s644 = smul.addr %s643, 8
          %s645 = scalar_lea.vmem [#allocation9], %s644
          %646 = dma.done %s642, 128
        $region72: #{tpu_custom_call.1} parent=67 // pred_fallthru
          _
      $region68: #{tpu_custom_call.1} parent=5 // pred_fallthru
        _
    $region6: #{tpu_custom_call.1} parent=1 // loop_footer
      %s22 = sadd.s32 1, %s18
    $region7: #{tpu_custom_call.1} parent=1 // loop_footer_branch
      %17 = sbr.rel target = $region3
    $region8: #{tpu_custom_call.1} parent=1 // loop_exit
      _
    %647 = vsyncpa [#allocation4], 1
    %s648 = scalar_lea.sflag [#allocation4], 1
    %649 = vsyncpa %s648, 1
    %650 = vsyncpa [#allocation7], 1
    %651 = vsyncpa [#allocation5], 1
    %s652 = scalar_lea.sflag [#allocation5], 1
    %653 = vsyncpa %s652, 1

</llo_original>
